<compile_context>
chip_gen: v6e
topology: v6e:2x2x1
jax: 0.10.0
libtpu: 0.0.40
codegen_flags: <defaults>
</compile_context>

<pallas_src>
import functools

import jax
import jax.numpy as jnp
from jax.experimental import pallas as pl
from jax.experimental.pallas import tpu as pltpu

_HALO = 128  # lane width of the halo block (must divide tile_t)


def _round_up(x, m):
    return ((x + m - 1) // m) * m


def _make_encoder_kernel(n_sub, tile_t):
    """out(F, tT) = W(F, K_pad) @ M(K_pad, tT), M built from the haloed tile."""

    def kernel(w_ref, p_ref, h_ref, out_ref):
        # w_ref  : (filters, K_pad)        resident in VMEM
        # p_ref  : (stride, tile_t)        P columns [t0, t0 + tile_t)
        # h_ref  : (stride, _HALO)         P columns [t0 + tile_t, ... + 128)
        # out_ref: (filters, tile_t)
        if n_sub == 1:
            m = p_ref[...]
        else:
            # (stride, tile_t + HALO); lane-shifted windows cover the j offsets.
            x_ext = jnp.concatenate([p_ref[...], h_ref[...]], axis=1)
            parts = [p_ref[...]] + [x_ext[:, j:j + tile_t]
                                    for j in range(1, n_sub)]
            m = jnp.concatenate(parts, axis=0)          # (K_pad, tile_t)
        acc = jnp.dot(w_ref[...], m, preferred_element_type=jnp.float32)
        out_ref[...] = acc.astype(out_ref.dtype)

    return kernel


@functools.partial(
    jax.jit,
    static_argnames=("filter_length", "stride", "tile_t", "compute_dtype",
                     "out_dtype"))
def encoder_forward(x, weight, *, filter_length, stride=None, tile_t=2048,
                    compute_dtype=None, out_dtype=None):
    """Forward pass of Encoder.

    x      : (B, L)
    weight : (filters, 1, filter_length)   (PyTorch Conv1d weight)
    returns: (B, filters, T) in PyTorch NCT layout.
    """
    if stride is None:
        stride = filter_length // 2
    s = int(stride)
    K = int(filter_length)
    B, L = x.shape
    filters = weight.shape[0]

    # pad(): same right-padding rule as the PyTorch module.
    padding = (K - L) % s
    L_pad = L + padding
    T = (L_pad - K) // s + 1
    assert T >= 1, "input shorter than one analysis window"

    # Each K-tap window is covered by n_sub stride-blocks (weight zero-padded
    # to K_pad taps, so s not dividing K is also handled).
    n_sub = -(-K // s)
    K_pad = n_sub * s
    assert n_sub <= _HALO, "filter_length too large relative to stride"

    # ---- T tiling: lane-dense tiles, >=4 grid steps when possible (v7x). ---
    tile_t = max(128, min(int(tile_t), _round_up(T, 128)))
    tile_t = _round_up(tile_t, 128)
    while tile_t > 128 and B * ((T + tile_t - 1) // tile_t) < 4:
        tile_t -= 128
    n_t = pl.cdiv(T, tile_t)

    # All input blocks (main + halo) stay fully in-bounds.
    T_padded = n_t * tile_t + _HALO
    L_total = T_padded * s
    assert L_total >= L

    # Single pre-pass: pad + free reshape + decimating transpose.
    #   P[b, r, t] = x_pad[b, t*s + r]
    x_pad = jnp.pad(x, ((0, 0), (0, L_total - L)))
    p = x_pad.reshape(B, T_padded, s).transpose(0, 2, 1)   # (B, s, T_padded)

    # Weight (filters, 1, K) -> (filters, K_pad), zero-padded taps.
    w2 = weight.reshape(filters, K)
    if K_pad != K:
        w2 = jnp.pad(w2, ((0, 0), (0, K_pad - K)))

    cdt = (jnp.dtype(compute_dtype) if compute_dtype is not None
           else jnp.promote_types(x.dtype, weight.dtype))
    p = p.astype(cdt)       # no-op in the default f32 path
    w2 = w2.astype(cdt)
    if out_dtype is None:
        out_dtype = x.dtype

    ratio = tile_t // _HALO
    itemsize_in = jnp.dtype(cdt).itemsize
    itemsize_out = jnp.dtype(out_dtype).itemsize
    cost = pl.CostEstimate(
        flops=2 * B * filters * K_pad * T,
        transcendentals=0,
        bytes_accessed=(B * s * T_padded * itemsize_in
                        + filters * K_pad * itemsize_in
                        + B * filters * T * itemsize_out))

    grid_spec = pltpu.PrefetchScalarGridSpec(
        num_scalar_prefetch=0,
        grid=(B, n_t),
        in_specs=[
            # Full filter bank resident in VMEM (constant block index).
            pl.BlockSpec((filters, K_pad), lambda b, t: (0, 0)),
            # Main decimated tile: lane-dense (s, tile_t); batch squeezed.
            pl.BlockSpec((None, s, tile_t), lambda b, t: (b, 0, t)),
            # 128-lane halo of the SAME array (next tile_t boundary).
            pl.BlockSpec((None, s, _HALO), lambda b, t: (b, 0, (t + 1) * ratio)),
        ],
        out_specs=pl.BlockSpec((None, filters, tile_t), lambda b, t: (b, 0, t)),
    )

    return pl.pallas_call(
        _make_encoder_kernel(n_sub, tile_t),
        out_shape=jax.ShapeDtypeStruct((B, filters, T), out_dtype),
        grid_spec=grid_spec,
        compiler_params=pltpu.CompilerParams(
            dimension_semantics=("parallel", "parallel"),
            vmem_limit_bytes=32 * 1024 * 1024,
        ),
        cost_estimate=cost,
    )(w2, p, p)   # p passed twice: same HBM buffer, two views (main + halo)


def _reference_forward(x, weight, filter_length, stride):
    """Pure-JAX reference (same semantics as the PyTorch module)."""
    B, L = x.shape
    padding = (filter_length - L) % stride
    xp = jnp.pad(x, ((0, 0), (0, padding)))[:, None, :]   # (B, 1, L_pad) NCW
    return jax.lax.conv_general_dilated(
        xp, weight, window_strides=(stride,), padding="VALID",
        dimension_numbers=("NCH", "OIH", "NCH"),
    )


if __name__ == "__main__":
    # Small, deterministic configuration (ConvTasNet-style encoder).
    filters = 32
    filter_length = 16
    stride = filter_length // 2   # 8
    batch = 2

    key = jax.random.PRNGKey(0)
    kx, kw = jax.random.split(key)
    weight = jax.random.normal(
        kw, (filters, 1, filter_length), dtype=jnp.float32) * 0.1

    # length=2050 -> pad() path, T=256 (two 128-wide T tiles per batch)
    # length=1003 -> pad() path, T=125 (partial / masked last T tile)
    for length in (2050, 1003):
        x = jax.random.normal(kx, (batch, length), dtype=jnp.float32)
        ref = jax.block_until_ready(
            _reference_forward(x, weight, filter_length, stride))

        out = jax.block_until_ready(
            encoder_forward(x, weight, filter_length=filter_length,
                            stride=stride))
        assert out.shape == ref.shape, (out.shape, ref.shape)
        err = float(jnp.max(jnp.abs(out - ref)))
        assert jnp.allclose(out, ref, atol=2e-4, rtol=2e-4), err

    # Opt-in bf16 input/compute path (accuracy tradeoff acknowledged).
    x = jax.random.normal(kx, (batch, 2050), dtype=jnp.float32)
    ref = _reference_forward(x, weight, filter_length, stride)
    out_bf16 = jax.block_until_ready(
        encoder_forward(x, weight, filter_length=filter_length, stride=stride,
                        compute_dtype=jnp.bfloat16))
    rel = float(jnp.linalg.norm(out_bf16 - ref) / jnp.linalg.norm(ref))
    assert rel < 3e-2, rel

    print("KERNEL_OK")
</pallas_src>

<mosaic_0001>
module attributes {stable_mosaic.version = 11 : i64} {
  func.func @kernel(%arg0: i32, %arg1: i32, %arg2: memref<32x16xf32, #tpu.memory_space<vmem>>, %arg3: memref<1x8x128xf32, #tpu.memory_space<vmem>>, %arg4: memref<1x8x128xf32, #tpu.memory_space<vmem>>, %arg5: memref<1x32x128xf32, #tpu.memory_space<vmem>>) attributes {dimension_semantics = [#tpu.dimension_semantics<parallel>, #tpu.dimension_semantics<parallel>], iteration_bounds = array<i64: 2, 2>, scalar_prefetch = 0 : i64, scratch_operands = 0 : i64, tpu.core_type = #tpu.core_type<tc>, window_params = [{pipeline_mode = #tpu.pipeline_mode<synchronous>, transform_indices = @transform_0, window_bounds = array<i64: 32, 16>}, {transform_indices = @transform_1, window_bounds = array<i64: 1, 8, 128>}, {transform_indices = @transform_2, window_bounds = array<i64: 1, 8, 128>}, {transform_indices = @transform_3, window_bounds = array<i64: 1, 32, 128>}]} {
    %c0 = arith.constant 0 : index
    %c0_0 = arith.constant 0 : index
    %c0_1 = arith.constant 0 : index
    %0 = vector.load %arg3[%c0, %c0_0, %c0_1] : memref<1x8x128xf32, #tpu.memory_space<vmem>>, vector<1x8x128xf32>
    %1 = vector.shape_cast %0 : vector<1x8x128xf32> to vector<8x128xf32>
    %c0_2 = arith.constant 0 : index
    %c0_3 = arith.constant 0 : index
    %c0_4 = arith.constant 0 : index
    %2 = vector.load %arg4[%c0_2, %c0_3, %c0_4] : memref<1x8x128xf32, #tpu.memory_space<vmem>>, vector<1x8x128xf32>
    %3 = vector.shape_cast %2 : vector<1x8x128xf32> to vector<8x128xf32>
    %4 = tpu.concatenate %1, %3 in 1 : vector<8x128xf32>, vector<8x128xf32> -> vector<8x256xf32>
    %c0_5 = arith.constant 0 : index
    %c0_6 = arith.constant 0 : index
    %c0_7 = arith.constant 0 : index
    %5 = vector.load %arg3[%c0_5, %c0_6, %c0_7] : memref<1x8x128xf32, #tpu.memory_space<vmem>>, vector<1x8x128xf32>
    %6 = vector.shape_cast %5 : vector<1x8x128xf32> to vector<8x128xf32>
    %7 = vector.extract_strided_slice %4 {offsets = [0, 1], sizes = [8, 128], strides = [1, 1]} : vector<8x256xf32> to vector<8x128xf32>
    %8 = tpu.concatenate %6, %7 in 0 : vector<8x128xf32>, vector<8x128xf32> -> vector<16x128xf32>
    %c0_8 = arith.constant 0 : index
    %c0_9 = arith.constant 0 : index
    %9 = vector.load %arg2[%c0_8, %c0_9] : memref<32x16xf32, #tpu.memory_space<vmem>>, vector<32x16xf32>
    %cst = arith.constant dense<0.000000e+00> : vector<32x128xf32>
    %10 = tpu.matmul %9, %8, %cst {dimension_numbers = #tpu.dot_dimension_numbers<[1], [0], [0], [1], [0, 0, 1, 1], [], []>} : vector<32x16xf32>, vector<16x128xf32>, vector<32x128xf32> -> vector<32x128xf32>
    %c0_10 = arith.constant 0 : index
    %c0_11 = arith.constant 0 : index
    %c0_12 = arith.constant 0 : index
    %11 = vector.load %arg5[%c0_10, %c0_11, %c0_12] : memref<1x32x128xf32, #tpu.memory_space<vmem>>, vector<1x32x128xf32>
    %12 = vector.shape_cast %11 : vector<1x32x128xf32> to vector<32x128xf32>
    %13 = vector.shape_cast %10 : vector<32x128xf32> to vector<1x32x128xf32>
    tpu.vector_store %arg5[%c0_10, %c0_11, %c0_12], %13 {strides = array<i32>} : memref<1x32x128xf32, #tpu.memory_space<vmem>>, vector<1x32x128xf32>,
    return
  }
  func.func @transform_0(%arg0: i32, %arg1: i32) -> (i32, i32) {
    %c0_i32 = arith.constant 0 : i32
    %c0_i32_0 = arith.constant 0 : i32
    %c0_i32_1 = arith.constant 0 : i32
    return %c0_i32, %c0_i32_0 : i32, i32
  }
  func.func @transform_1(%arg0: i32, %arg1: i32) -> (i32, i32, i32) {
    %c0_i32 = arith.constant 0 : i32
    %c0_i32_0 = arith.constant 0 : i32
    return %arg0, %c0_i32, %arg1 : i32, i32, i32
  }
  func.func @transform_2(%arg0: i32, %arg1: i32) -> (i32, i32, i32) {
    %c1_i32 = arith.constant 1 : i32
    %0 = arith.addi %arg1, %c1_i32 : i32
    %c1_i32_0 = arith.constant 1 : i32
    %1 = arith.muli %0, %c1_i32_0 : i32
    %c0_i32 = arith.constant 0 : i32
    %c0_i32_1 = arith.constant 0 : i32
    return %arg0, %c0_i32, %1 : i32, i32, i32
  }
  func.func @transform_3(%arg0: i32, %arg1: i32) -> (i32, i32, i32) {
    %c0_i32 = arith.constant 0 : i32
    %c0_i32_0 = arith.constant 0 : i32
    return %arg0, %c0_i32, %arg1 : i32, i32, i32
  }
}

</mosaic_0001>

<llo_original>
// kernel: encoder_forward.1
$region0: #{encoder_forward.1}
  #allocation0 [shape = 'u32[]', space=smem, size = 0x4, offset = 0x4, fixed_abs, tag = 'smem constant byte address 0x4 - core index']
  #allocation1 [shape = 'u32[144,128]{1,0:T(1,128)}', space=vmem, size = 0x12000, scoped, tag = 'internal scratch']
  %s0 = inlined_call_operand.vmem [shape: f32[32,16], index: 0, kind: input, shape index: {}]
  %s1 = inlined_call_operand.vmem [shape: f32[2,8,384], index: 1, kind: input, shape index: {}, may-alias: {1,2}]
  %s2 = inlined_call_operand.vmem [shape: f32[2,8,384], index: 2, kind: input, shape index: {}, may-alias: {1,2}]
  %s3 = inlined_call_operand.hbm [shape: f32[2,32,256], index: 3, kind: output, shape index: {}]
  %s4 = sld [smem:[#allocation0]]
  $region45: #{encoder_forward.1} parent=0
    _
  %s6 = ssub.s32 1, %s4
  %s7 = scalar_select 0, %s6, %s4
  $region1: #{encoder_forward.1} parent=0
    #allocation2 [shape = 'u8[32768]{0}', space=vmem, size = 0x8000, scoped, tag = 'output window, operand 0']
    #allocation3 [shape = 's32[2]{0}', space=sflag, size = 0x8, scoped, tag = 'scoped memory for encoder_forward.1']
    %8 = vsyncpa [#allocation3], 0
    %s9 = scalar_lea.sflag [#allocation3], 1
    %10 = vsyncpa %s9, 0
    loop: start=0, step=1, limit=6
    $region2: #{encoder_forward.1} parent=1 // loop_pre_header
      _
    $region3: #{encoder_forward.1} parent=1 // loop_header
      %s12 = sphi 0, %s16
      %p13 = scmp.ge.s32.totalorder %s12, 6
      %s19 = sphi 0, %s31
      %s20 = sphi 0, %s27
      %s21 = sphi 0, %s19
      %s22 = sphi 0, %s20
      %s23 = sphi 0, %s21
      %s24 = sphi 0, %s22
      %s32 = sphi 0, %s32
      %s34 = sphi 0, %s32
      %s35 = sphi 0, %s34
      %s49 = sphi 0, %s35
      %s57 = sphi 0, %s59
      %s60 = sphi 0, %s57
      %s61 = sphi 0, %s60
      %s77 = sphi 0, %s61
      %s87 = sphi 0, %s89
      %s90 = sphi 0, %s87
      %s91 = sphi 0, %s90
      %s107 = sphi 0, %s91
      %s115 = sphi 0, %s117
      %s118 = sphi 0, %s115
      %s119 = sphi 0, %s118
      %s135 = sphi 0, %s119
    $region4: #{encoder_forward.1} parent=1 // loop_header_branch
      %15 = sbr.rel (%p13) target = $region8
    $region5: #{encoder_forward.1} parent=1 // loop_body
      %s17 = ssub.s32 %s12, 1
      %s18 = ssub.s32 %s12, 2
      %s25 = sadd.s32 1, %s20
      %p26 = scmp.ge.s32.totalorder %s25, 2
      %s27 = scalar_select %p26, 0, %s25
      %s28 = sadd.s32 1, %s19
      %s29 = scalar_select %p26, %s28, %s19
      %p30 = scmp.ge.s32.totalorder %s29, 2
      %s31 = scalar_select %p30, 0, %s29
      %s33 = sadd.s32 %s32, 1
      %p36 = scmp.eq.s32.totalorder %s12, 3
      %p37 = scmp.ne.s32.totalorder %s32, %s34
      %p38 = scmp.eq.s32.totalorder %s12, 0
      %p39 = por %p37, %p38
      %p40 = scmp.ne.s32.totalorder %s32, %s34
      %p41 = scmp.eq.s32.totalorder %s17, 3
      %p42 = por %p40, %p41
      %p43 = scmp.ne.s32.totalorder %s34, %s35
      %p44 = scmp.eq.s32.totalorder %s17, 0
      %p45 = por %p43, %p44
      %p46 = scmp.ne.s32.totalorder %s34, %s35
      %p47 = scmp.eq.s32.totalorder %s18, 3
      %p48 = por %p46, %p47
      %p50 = scmp.ne.s32.totalorder %s35, %s49
      %p51 = scmp.eq.s32.totalorder %s18, 0
      %p52 = por %p50, %p51
      %s53 = ssub.s32 %s19, %s31
      %s54 = ssub.s32 %s20, %s27
      %s55 = sor.u32 %s53, %s54
      %p56 = scmp.eq.s32.totalorder %s55, 0
      %s58 = sadd.s32 %s57, 1
      %s59 = scalar_select %p56, %s57, %s58
      %p62 = pneg %p56
      %p63 = scmp.eq.s32.totalorder %s12, 3
      %p64 = por %p62, %p63
      %p65 = scmp.ne.s32.totalorder %s57, %s60
      %p66 = scmp.eq.s32.totalorder %s12, 0
      %p67 = por %p65, %p66
      %p68 = scmp.ne.s32.totalorder %s57, %s60
      %p69 = scmp.eq.s32.totalorder %s17, 3
      %p70 = por %p68, %p69
      %p71 = scmp.ne.s32.totalorder %s60, %s61
      %p72 = scmp.eq.s32.totalorder %s17, 0
      %p73 = por %p71, %p72
      %p74 = scmp.ne.s32.totalorder %s60, %s61
      %p75 = scmp.eq.s32.totalorder %s18, 3
      %p76 = por %p74, %p75
      %p78 = scmp.ne.s32.totalorder %s61, %s77
      %p79 = scmp.eq.s32.totalorder %s18, 0
      %p80 = por %p78, %p79
      %s81 = sadd.s32 %s20, 1
      %s82 = sadd.s32 %s27, 1
      %s83 = ssub.s32 %s19, %s31
      %s84 = ssub.s32 %s81, %s82
      %s85 = sor.u32 %s83, %s84
      %p86 = scmp.eq.s32.totalorder %s85, 0
      %s88 = sadd.s32 %s87, 1
      %s89 = scalar_select %p86, %s87, %s88
      %p92 = pneg %p86
      %p93 = scmp.eq.s32.totalorder %s12, 3
      %p94 = por %p92, %p93
      %p95 = scmp.ne.s32.totalorder %s87, %s90
      %p96 = scmp.eq.s32.totalorder %s12, 0
      %p97 = por %p95, %p96
      %p98 = scmp.ne.s32.totalorder %s87, %s90
      %p99 = scmp.eq.s32.totalorder %s17, 3
      %p100 = por %p98, %p99
      %p101 = scmp.ne.s32.totalorder %s90, %s91
      %p102 = scmp.eq.s32.totalorder %s17, 0
      %p103 = por %p101, %p102
      %p104 = scmp.ne.s32.totalorder %s90, %s91
      %p105 = scmp.eq.s32.totalorder %s18, 3
      %p106 = por %p104, %p105
      %p108 = scmp.ne.s32.totalorder %s91, %s107
      %p109 = scmp.eq.s32.totalorder %s18, 0
      %p110 = por %p108, %p109
      %s111 = ssub.s32 %s19, %s31
      %s112 = ssub.s32 %s20, %s27
      %s113 = sor.u32 %s111, %s112
      %p114 = scmp.eq.s32.totalorder %s113, 0
      %s116 = sadd.s32 %s115, 1
      %s117 = scalar_select %p114, %s115, %s116
      %p120 = pneg %p114
      %p121 = scmp.eq.s32.totalorder %s12, 3
      %p122 = por %p120, %p121
      %p123 = scmp.ne.s32.totalorder %s115, %s118
      %p124 = scmp.eq.s32.totalorder %s12, 0
      %p125 = por %p123, %p124
      %p126 = scmp.ne.s32.totalorder %s115, %s118
      %p127 = scmp.eq.s32.totalorder %s17, 3
      %p128 = por %p126, %p127
      %p129 = scmp.ne.s32.totalorder %s118, %s119
      %p130 = scmp.eq.s32.totalorder %s17, 0
      %p131 = por %p129, %p130
      %p132 = scmp.ne.s32.totalorder %s118, %s119
      %p133 = scmp.eq.s32.totalorder %s18, 3
      %p134 = por %p132, %p133
      %p136 = scmp.ne.s32.totalorder %s119, %s135
      %p137 = scmp.eq.s32.totalorder %s18, 0
      %p138 = por %p136, %p137
      %p139 = scmp.le.s32.totalorder 1, %s12
      %p140 = scmp.lt.s32.totalorder %s12, 5
      %p141 = pnand %p139, %p140
      %p142 = pneg %p141
      // Predicated region
      $region9: #{encoder_forward.1} parent=5 // pred_check
        _
      $region10: #{encoder_forward.1} parent=5 // pred_check_branch
        %144 = sbr.rel (%p141) target = $region12
      $region11: #{encoder_forward.1} parent=5 // pred_region
        %s145 = ssub.s32 %s12, 1
        // Predicated region
        $region13: #{encoder_forward.1} parent=11 // pred_check
          %p146 = pneg %p45
        $region14: #{encoder_forward.1} parent=11 // pred_check_branch
          %148 = sbr.rel (%p146) target = $region16
        $region15: #{encoder_forward.1} parent=11 // pred_region
          _
        $region16: #{encoder_forward.1} parent=11 // pred_fallthru
          _
      $region12: #{encoder_forward.1} parent=5 // pred_fallthru
        _
      %p149 = scmp.lt.s32.totalorder %s12, 4
      // Predicated region
      $region17: #{encoder_forward.1} parent=5 // pred_check
        %p150 = pneg %p149
      $region18: #{encoder_forward.1} parent=5 // pred_check_branch
        %152 = sbr.rel (%p150) target = $region20
      $region19: #{encoder_forward.1} parent=5 // pred_region
        // Predicated region
        $region21: #{encoder_forward.1} parent=19 // pred_check
          %p153 = pneg %p67
        $region22: #{encoder_forward.1} parent=19 // pred_check_branch
          %155 = sbr.rel (%p153) target = $region24
        $region23: #{encoder_forward.1} parent=19 // pred_region
          %p156 = scmp.lt.s32.totalorder %s19, 1
          %s157 = scalar_select %p156, %s19, 1
          %p158 = scmp.lt.s32.totalorder %s20, 2
          %s159 = scalar_select %p158, %s20, 2
          %s160 = smul.addr %s157, 3
          %s161 = sadd.s32 %s159, %s160
          %s162 = smul.addr %s161, 8
          %s163 = scalar_lea.vmem %s1, %s162
        $region24: #{encoder_forward.1} parent=19 // pred_fallthru
          _
        // Predicated region
        $region25: #{encoder_forward.1} parent=19 // pred_check
          %p164 = pneg %p97
        $region26: #{encoder_forward.1} parent=19 // pred_check_branch
          %166 = sbr.rel (%p164) target = $region28
        $region27: #{encoder_forward.1} parent=19 // pred_region
          %s167 = sadd.s32 %s20, 1
          %p168 = scmp.lt.s32.totalorder %s19, 1
          %s169 = scalar_select %p168, %s19, 1
          %p170 = scmp.lt.s32.totalorder %s167, 2
          %s171 = scalar_select %p170, %s167, 2
          %s172 = smul.addr %s169, 3
          %s173 = sadd.s32 %s171, %s172
          %s174 = smul.addr %s173, 8
          %s175 = scalar_lea.vmem %s2, %s174
          %s176 = sadd.s32 %s20, 1
        $region28: #{encoder_forward.1} parent=19 // pred_fallthru
          _
      $region20: #{encoder_forward.1} parent=5 // pred_fallthru
        _
      %p177 = scmp.le.s32.totalorder 1, %s12
      %p178 = scmp.lt.s32.totalorder %s12, 5
      %p179 = pnand %p177, %p178
      %p180 = pneg %p179
      // Predicated region
      $region29: #{encoder_forward.1} parent=5 // pred_check
        _
      $region30: #{encoder_forward.1} parent=5 // pred_check_branch
        %182 = sbr.rel (%p179) target = $region32
      $region31: #{encoder_forward.1} parent=5 // pred_region
        %s183 = ssub.s32 %s12, 1
        %p184 = pneg %p45
        %p185 = pneg %p42
        %p186 = scmp.lt.s32.totalorder %s21, 1
        %s187 = scalar_select %p186, %s21, 1
        %p188 = scmp.lt.s32.totalorder %s22, 2
        %s189 = scalar_select %p188, %s22, 2
        %s190 = smul.addr %s187, 3
        %s191 = sadd.s32 %s189, %s190
        %s192 = smul.addr %s191, 8
        %s193 = scalar_lea.vmem %s1, %s192
        %p194 = pneg %p73
        %p195 = pneg %p70
        %s196 = sadd.s32 %s22, 1
        %p197 = scmp.lt.s32.totalorder %s21, 1
        %s198 = scalar_select %p197, %s21, 1
        %p199 = scmp.lt.s32.totalorder %s196, 2
        %s200 = scalar_select %p199, %s196, 2
        %s201 = smul.addr %s198, 3
        %s202 = sadd.s32 %s200, %s201
        %s203 = smul.addr %s202, 8
        %s204 = scalar_lea.vmem %s2, %s203
        %p205 = pneg %p103
        %p206 = pneg %p100
        %p207 = pneg %p131
        %p208 = pneg %p128
        %s209 = sand.u32 %s118, 1
        %s210 = scalar_lea.sflag [#allocation3], %s209
        %s211 = sand.u32 %s118, 1
        %s212 = smul.addr %s211, 32
        %s213 = scalar_lea.vmem [#allocation2], %s212
        %p214 = scmp.lt.s32.totalorder %s21, 1
        %s215 = scalar_select %p214, %s21, 1
        %p216 = scmp.lt.s32.totalorder %s22, 2
        %s217 = scalar_select %p216, %s22, 2
        %s218 = smul.addr %s215, 3
        %s219 = sadd.s32 %s217, %s218
        %s220 = smul.addr %s219, 8
        %s221 = scalar_lea.vmem %s1, %s220
        %s222 = sadd.s32 %s22, 1
        %p223 = scmp.lt.s32.totalorder %s21, 1
        %s224 = scalar_select %p223, %s21, 1
        %p225 = scmp.lt.s32.totalorder %s222, 2
        %s226 = scalar_select %p225, %s222, 2
        %s227 = smul.addr %s224, 3
        %s228 = sadd.s32 %s226, %s227
        %s229 = smul.addr %s228, 8
        %s230 = scalar_lea.vmem %s2, %s229
        %s231 = sadd.s32 %s22, 1
        %v232 = vld [vmem:[%s221] sm:$0xff]
        %v233 = vld [vmem:[%s230] sm:$0xff]
        %236 = vrot.lane.b32.xlu0 %v232, 127
        %v237 = vpop.permute.xlu0 %236
        %238 = vrot.lane.b32.xlu0 %v233, 127
        %v239 = vpop.permute.xlu0 %238
        %vm240 = vcmask 1039360
        %v241 = vsel %vm240, %v237, %v239
        %v243 = vld [vmem:[%s0] sm:$0xff]
        %v244 = vld [vmem:[%s0 + $0x8] sm:$0xff]
        %v245 = vld [vmem:[%s0 + $0x10] sm:$0xff]
        %v246 = vld [vmem:[%s0 + $0x18] sm:$0xff]
        %vm247 = vcmask 130048
        %v249 = vsel %vm247, %v243, 0
        %v252 = vsel %vm247, %v244, 0
        %v255 = vsel %vm247, %v245, 0
        %v258 = vsel %vm247, %v246, 0
        %260 = vmatprep.subr.mxu0 0.0
        %261 = vmatpush1.msra.mxu0 0.0
        %262 = vmatprep.subr.mxu0 0.0
        %263 = vmatpush1.msra.mxu0 0.0
        %264 = vmatprep.subr.mxu0 0.0
        %265 = vmatpush1.msra.mxu0 0.0
        %266 = vmatprep.subr.mxu0 0.0
        %267 = vmatpush1.msra.mxu0 0.0
        %268 = vmatprep.subr.mxu0 0.0
        %269 = vmatpush1.msra.mxu0 0.0
        %270 = vmatprep.subr.mxu0 0.0
        %271 = vmatpush1.msra.mxu0 0.0
        %272 = vmatprep.subr.mxu0 0.0
        %273 = vmatpush1.msra.mxu0 0.0
        %274 = vmatprep.subr.mxu0 0.0
        %275 = vmatpush1.msra.mxu0 0.0
        %276 = vmatprep.subr.mxu0 0.0
        %277 = vmatpush1.msra.mxu0 0.0
        %278 = vmatprep.subr.mxu0 0.0
        %279 = vmatpush1.msra.mxu0 0.0
        %280 = vmatprep.subr.mxu0 0.0
        %281 = vmatpush1.msra.mxu0 0.0
        %282 = vmatprep.subr.mxu0 0.0
        %283 = vmatpush1.msra.mxu0 0.0
        %284 = vmatprep.subr.mxu0 0.0
        %285 = vmatpush1.msra.mxu0 0.0
        %286 = vmatprep.subr.mxu0 0.0
        %287 = vmatpush1.msra.mxu0 0.0
        %288 = vmatprep.subr.mxu0 0.0
        %289 = vmatpush1.msra.mxu0 %v241
        %290 = vmatprep.subr.mxu0 0.0
        %291 = vmatpush1.msra.mxu0 %v232
        %292 = vmatprep.subr.mxu0 0.0
        %293 = vmatpush2.msra.mxu0 0.0
        %294 = vmatprep.subr.mxu0 0.0
        %295 = vmatpush2.msra.mxu0 0.0
        %296 = vmatprep.subr.mxu0 0.0
        %297 = vmatpush2.msra.mxu0 0.0
        %298 = vmatprep.subr.mxu0 0.0
        %299 = vmatpush2.msra.mxu0 0.0
        %300 = vmatprep.subr.mxu0 0.0
        %301 = vmatpush2.msra.mxu0 0.0
        %302 = vmatprep.subr.mxu0 0.0
        %303 = vmatpush2.msra.mxu0 0.0
        %304 = vmatprep.subr.mxu0 0.0
        %305 = vmatpush2.msra.mxu0 0.0
        %306 = vmatprep.subr.mxu0 0.0
        %307 = vmatpush2.msra.mxu0 0.0
        %308 = vmatprep.subr.mxu0 0.0
        %309 = vmatpush2.msra.mxu0 0.0
        %310 = vmatprep.subr.mxu0 0.0
        %311 = vmatpush2.msra.mxu0 0.0
        %312 = vmatprep.subr.mxu0 0.0
        %313 = vmatpush2.msra.mxu0 0.0
        %314 = vmatprep.subr.mxu0 0.0
        %315 = vmatpush2.msra.mxu0 0.0
        %316 = vmatprep.subr.mxu0 0.0
        %317 = vmatpush2.msra.mxu0 0.0
        %318 = vmatprep.subr.mxu0 0.0
        %319 = vmatpush2.msra.mxu0 0.0
        %320 = vmatprep.subr.mxu0 0.0
        %321 = vmatpush2.msra.mxu0 0.0
        %322 = vmatprep.subr.mxu0 0.0
        %323 = vmatpush2.msra.mxu0 0.0
        %324 = vmatprep.mubr.f32.mxu0 0.0
        %325 = vmatmul.mubr.f32.gmra.mxu0 %v249
        %v326 = vpop.f32.mrf.mxu0
        %v327 = vadd.f32 0.0, %v326
        %v328 = vpop.f32.mrf.mxu0
        %329 = vmatprep.mubr.f32.mxu0 0.0
        %330 = vmatmul.mubr.f32.gmra.mxu0 %v252
        %v331 = vpop.f32.mrf.mxu0
        %v332 = vadd.f32 0.0, %v331
        %v333 = vpop.f32.mrf.mxu0
        %334 = vmatprep.mubr.f32.mxu0 0.0
        %335 = vmatmul.mubr.f32.gmra.mxu0 %v255
        %v336 = vpop.f32.mrf.mxu0
        %v337 = vadd.f32 0.0, %v336
        %v338 = vpop.f32.mrf.mxu0
        %339 = vmatprep.mubr.f32.mxu0 0.0
        %340 = vmatmul.mubr.f32.gmra.mxu0 %v258
        %v341 = vpop.f32.mrf.mxu0
        %v342 = vadd.f32 0.0, %v341
        %v343 = vpop.f32.mrf.mxu0
        %344 = vdwg.mxu0
        %345 = vst [vmem:[%s213] sm:$0xff] %v327
        %346 = vst [vmem:[%s213 + $0x8] sm:$0xff] %v332
        %347 = vst [vmem:[%s213 + $0x10] sm:$0xff] %v337
        %348 = vst [vmem:[%s213 + $0x18] sm:$0xff] %v342
        %s349 = sand.u32 %s118, 1
        %s350 = scalar_lea.sflag [#allocation3], %s349
        %s351 = sand.u32 %s118, 1
        %s352 = smul.addr %s351, 32
        %s353 = scalar_lea.vmem [#allocation2], %s352
        // Predicated region
        $region33: #{encoder_forward.1} parent=31 // pred_check
          %p354 = pneg %p128
        $region34: #{encoder_forward.1} parent=31 // pred_check_branch
          %356 = sbr.rel (%p354) target = $region36
        $region35: #{encoder_forward.1} parent=31 // pred_region
          %s358 = ssub.s32 512, 512
          %359 = vsyncadd %s350, %s358
          %s360 = smul.addr %s21, 8
          %s361 = sadd.s32 %s22, %s360
          %s362 = smul.addr %s361, 128
          %s363 = scalar_lea.hbm %s3, %s362
          %s364 = sshll.u32 %s353, 4
          %s365 = int_to_ptr.vmem [resolvable:$true] %s364
          %370 = dma.vmem_to_hbm [thread:$0]  %s365, 512, %s363, %s350, 128, 256, 8
        $region36: #{encoder_forward.1} parent=31 // pred_fallthru
          _
      $region32: #{encoder_forward.1} parent=5 // pred_fallthru
        _
      %p371 = scmp.le.s32.totalorder 2, %s12
      // Predicated region
      $region37: #{encoder_forward.1} parent=5 // pred_check
        %p372 = pneg %p371
      $region38: #{encoder_forward.1} parent=5 // pred_check_branch
        %374 = sbr.rel (%p372) target = $region40
      $region39: #{encoder_forward.1} parent=5 // pred_region
        %s375 = ssub.s32 %s12, 2
        // Predicated region
        $region41: #{encoder_forward.1} parent=39 // pred_check
          %p376 = pneg %p134
        $region42: #{encoder_forward.1} parent=39 // pred_check_branch
          %378 = sbr.rel (%p376) target = $region44
        $region43: #{encoder_forward.1} parent=39 // pred_region
          %s379 = sand.u32 %s119, 1
          %s380 = scalar_lea.sflag [#allocation3], %s379
          %s381 = sand.u32 %s119, 1
          %s382 = smul.addr %s381, 32
          %s383 = scalar_lea.vmem [#allocation2], %s382
          %384 = dma.done %s380, 512
        $region44: #{encoder_forward.1} parent=39 // pred_fallthru
          _
      $region40: #{encoder_forward.1} parent=5 // pred_fallthru
        _
    $region6: #{encoder_forward.1} parent=1 // loop_footer
      %s16 = sadd.s32 1, %s12
    $region7: #{encoder_forward.1} parent=1 // loop_footer_branch
      %11 = sbr.rel target = $region3
    $region8: #{encoder_forward.1} parent=1 // loop_exit
      _
    %385 = vsyncpa [#allocation3], 1
    %s386 = scalar_lea.sflag [#allocation3], 1
    %387 = vsyncpa %s386, 1

</llo_original>
